<compile_context>
chip_gen: v6e
topology: v6e:2x2x1
jax: 0.10.0
libtpu: 0.0.40
codegen_flags: <defaults>
</compile_context>

<pallas_src>
import functools

import jax
import jax.numpy as jnp
from jax.experimental import pallas as pl
from jax.experimental.pallas import tpu as pltpu

LANE = 128


def _cdiv(a, b):
    return -(-a // b)


def _tpu_config():
    """(TensorCores per chip, target HBM bytes per input block, scoped VMEM limit)."""
    kind = ""
    try:
        kind = (getattr(jax.devices()[0], "device_kind", "") or "").lower()
    except Exception:
        pass
    if "v7" in kind or "7x" in kind:
        # v7x: 2 TCs/chip, ~3.2 TB/s HBM, 64 MiB physical VMEM per TC.
        return 2, 2 * 1024 * 1024, 40 * 1024 * 1024
    if "v6" in kind:
        # v6e: 1 TC, 128 MiB VMEM -> big blocks, generous scoped limit.
        return 1, 2 * 1024 * 1024, 64 * 1024 * 1024
    # v5e / unknown: smaller blocks, but still above the 16 MiB scoped default.
    return 1, 1 * 1024 * 1024, 32 * 1024 * 1024


_NUM_TC, _TARGET_BLOCK_BYTES, _VMEM_LIMIT_BYTES = _tpu_config()


def _abs_diff_acc_kernel(p_ref, t_ref, acc_ref, *, rows, tile_rows,
                         tiles_per_shard, num_tiles, need_mask, small_acc):
    """acc += (row-group reduced) |p - t| for the current tile."""
    i = pl.program_id(1)                      # tile index within this shard

    @pl.when(i == 0)
    def _init():
        acc_ref[...] = jnp.zeros_like(acc_ref)

    diff = jnp.abs(p_ref[...].astype(jnp.float32)
                   - t_ref[...].astype(jnp.float32))

    def _reduce(d):
        if small_acc:
            # Tile-aligned reshape (rows grouped by (8,128) vreg tiles) + sum
            # over the leading axis: pure VPU adds into one (8, 128) vreg.
            return d.reshape(tile_rows // 8, 8, LANE).sum(axis=0)
        return d

    if not need_mask:
        acc_ref[...] += _reduce(diff)
    else:
        c = pl.program_id(0)                  # shard (TensorCore) index
        tile_idx = c * tiles_per_shard + i    # logical (unclamped) tile index

        @pl.when(tile_idx < num_tiles - 1)
        def _interior():                      # fast path: full, valid tile
            acc_ref[...] += _reduce(diff)

        @pl.when(tile_idx >= num_tiles - 1)
        def _tail():                          # last real tile or clamped dup
            row0 = tile_idx * tile_rows
            local = jax.lax.broadcasted_iota(jnp.int32, (tile_rows, LANE), 0)
            # NOTE: must stay a select (jnp.where), NOT a multiply — the
            # partial / clamped-duplicate blocks may hold NaN/Inf garbage.
            masked = jnp.where(row0 + local < rows, diff, 0.0)
            acc_ref[...] += _reduce(masked)


def _abs_diff_partial_sums(p2, t2, rows, *, tile_rows_override=None,
                           num_shards_override=None):
    """Returns a small f32 array whose sum is sum(|p2 - t2|) over (rows, 128)."""
    itemsize = jnp.dtype(p2.dtype).itemsize
    # Scale rows by the element size so the HBM block stays ~_TARGET_BLOCK_BYTES.
    max_rows = max(8, (_TARGET_BLOCK_BYTES // (LANE * itemsize)) // 8 * 8)
    if tile_rows_override is not None:
        tile_rows = min(int(tile_rows_override), rows)
    else:
        tile_rows = rows if rows <= max_rows else max_rows
    num_tiles = _cdiv(rows, tile_rows)
    small_acc = (tile_rows % 8 == 0)
    acc_rows = 8 if small_acc else tile_rows

    def run(num_shards, sems, n_buf):
        tiles_per_shard = _cdiv(num_tiles, num_shards)
        # Invariant: whenever shard-clamped duplicate blocks or a partial last
        # tile can occur, need_mask must be True so they are zeroed in-kernel.
        need_mask = (num_shards * tiles_per_shard != num_tiles
                     or rows % tile_rows != 0)

        def in_map(c, i):
            # Clamp so the DMA never targets a fully out-of-bounds block; the
            # in-kernel row mask zeroes clamped / partial rows.
            return (jnp.minimum(c * tiles_per_shard + i, num_tiles - 1), 0)

        def make_in_spec():
            if n_buf == 2:
                return pl.BlockSpec((tile_rows, LANE), in_map)
            return pl.BlockSpec((tile_rows, LANE), in_map,
                                pipeline_mode=pl.Buffered(n_buf))

        kernel = functools.partial(
            _abs_diff_acc_kernel, rows=rows, tile_rows=tile_rows,
            tiles_per_shard=tiles_per_shard, num_tiles=num_tiles,
            need_mask=need_mask, small_acc=small_acc)

        return pl.pallas_call(
            kernel,
            out_shape=jax.ShapeDtypeStruct((num_shards, acc_rows, LANE),
                                           jnp.float32),
            grid_spec=pltpu.PrefetchScalarGridSpec(
                num_scalar_prefetch=0,
                grid=(num_shards, tiles_per_shard),
                in_specs=[make_in_spec(), make_in_spec()],
                out_specs=pl.BlockSpec((None, acc_rows, LANE),
                                       lambda c, i: (c, 0, 0)),
            ),
            compiler_params=pltpu.CompilerParams(
                dimension_semantics=sems,
                vmem_limit_bytes=_VMEM_LIMIT_BYTES),
        )(p2, t2)

    if num_shards_override is not None:      # test hook: force tiling config
        ns = max(1, min(int(num_shards_override), num_tiles))
        return run(ns, ("parallel", "arbitrary"), 2)

    if _NUM_TC >= 2 and num_tiles >= 2:
        # v7x: split the stream across both TensorCores and deepen the input
        # pipeline.  Fall back to the portable configuration if this chip /
        # JAX build rejects CORE_PARALLEL or Buffered(3).
        try:
            core_par = getattr(pltpu, "CORE_PARALLEL", None)
            arb = getattr(pltpu, "ARBITRARY", "arbitrary")
            sems = ((core_par, arb) if core_par is not None
                    else ("parallel", "arbitrary"))
            out = run(2, sems, 3)
            jax.block_until_ready(out)       # no-op on tracers
            return out
        except Exception:
            pass
    return run(1, ("parallel", "arbitrary"), 2)


def _weighted_l1_mean(pred, target, weight, *, _test_tile_rows=None,
                      _test_num_shards=None):
    """mean(weight * |pred - target|) with a scalar weight, via Pallas."""
    assert pred.shape == target.shape, (pred.shape, target.shape)
    n_elem = int(pred.size)
    w = jnp.asarray(weight, jnp.float32).reshape(-1)[0]

    flat_p = pred.reshape(-1)        # zero-copy flatten of a contiguous array
    flat_t = target.reshape(-1)
    rows = n_elem // LANE
    rem = n_elem - rows * LANE

    total = jnp.float32(0.0)
    if rem:
        # <128-element lane tail: tiny plain-JAX sum instead of jnp.pad-ing
        # (and re-streaming) both full operands.
        tail_p = flat_p[rows * LANE:].astype(jnp.float32)
        tail_t = flat_t[rows * LANE:].astype(jnp.float32)
        total = total + jnp.sum(jnp.abs(tail_p - tail_t))

    if rows > 0:
        if rem:
            # TODO(synk): this static slice may still materialize a copy of the
            # main slab in XLA; it is only hit when numel % 128 != 0.
            flat_p = flat_p[: rows * LANE]
            flat_t = flat_t[: rows * LANE]
        p2 = flat_p.reshape(rows, LANE)
        t2 = flat_t.reshape(rows, LANE)
        partial = _abs_diff_partial_sums(
            p2, t2, rows, tile_rows_override=_test_tile_rows,
            num_shards_override=_test_num_shards)
        # Plain f32 lane-slot accumulation; fine for typical loss magnitudes.
        total = total + jnp.sum(partial, dtype=jnp.float32)

    # NOTE: weight is applied as a scalar (matches the list-dispatch weight[n]);
    # per-element weight tensors are not supported by this flavour.
    return total * w / jnp.float32(n_elem)


class BaseLoss:
    """JAX/Pallas port of the PyTorch BaseLoss dispatch logic."""

    def __call__(self, preds, targets, weight=None):
        if isinstance(preds, (list, tuple)):
            n = len(preds)
            if weight is None:
                weight = jnp.ones((n,), jnp.float32)
            # TODO(synk): fuse the per-scale streams into one pallas_call
            # (scalar-prefetched per-entry offsets + weights) to drop N-1
            # kernel launches for many small scales.
            errs = [self._forward(preds[i], targets[i], weight[i])
                    for i in range(n)]
            return jnp.mean(jnp.stack(errs))
        else:
            if weight is None:
                weight = jnp.ones((1,), jnp.float32)
            return self._forward(preds, targets, weight)

    def _forward(self, pred, target, weight):
        # TODO(synk): BaseLoss._forward is abstract in PyTorch; we use the
        # canonical L1 subclass: mean(weight * |pred - target|), scalar weight.
        return _weighted_l1_mean(pred, target, weight)


if __name__ == "__main__":
    key = jax.random.PRNGKey(0)
    k1, k2, k3, k4, k5, k6 = jax.random.split(key, 6)

    loss_fn = BaseLoss()

    # 1) Single tensor, NCHW, numel % 128 == 0 (single-tile fast path).
    pred = jax.random.normal(k1, (2, 4, 16, 16), jnp.float32)
    targ = jax.random.normal(k2, (2, 4, 16, 16), jnp.float32)
    err_single = loss_fn(pred, targ)
    jax.block_until_ready(err_single)
    ref_single = jnp.mean(jnp.abs(pred - targ))
    assert jnp.allclose(err_single, ref_single, rtol=1e-5, atol=1e-5)

    # 2) List dispatch with explicit per-scale weights.
    pred_l = [pred, jax.random.normal(k3, (2, 4, 8, 8), jnp.float32)]
    targ_l = [targ, jax.random.normal(k4, (2, 4, 8, 8), jnp.float32)]
    wts = jnp.array([1.0, 0.5], jnp.float32)
    err_list = loss_fn(pred_l, targ_l, wts)
    jax.block_until_ready(err_list)
    ref_list = jnp.mean(jnp.stack([
        jnp.mean(wts[0] * jnp.abs(pred_l[0] - targ_l[0])),
        jnp.mean(wts[1] * jnp.abs(pred_l[1] - targ_l[1])),
    ]))
    assert jnp.allclose(err_list, ref_list, rtol=1e-5, atol=1e-5)

    # 3) bf16 inputs: native-dtype HBM stream, in-kernel cast to f32.
    pred_bf = pred.astype(jnp.bfloat16)
    targ_bf = targ.astype(jnp.bfloat16)
    err_bf = loss_fn(pred_bf, targ_bf)
    jax.block_until_ready(err_bf)
    ref_bf = jnp.mean(jnp.abs(pred_bf.astype(jnp.float32)
                              - targ_bf.astype(jnp.float32)))
    assert jnp.allclose(err_bf, ref_bf, rtol=1e-2, atol=1e-2)

    # 4) numel % 128 != 0: lane tail handled in plain JAX (no jnp.pad copies).
    pred_r = jax.random.normal(k5, (2, 4, 15, 15), jnp.float32)
    targ_r = jax.random.normal(k6, (2, 4, 15, 15), jnp.float32)
    err_r = loss_fn(pred_r, targ_r)
    jax.block_until_ready(err_r)
    ref_r = jnp.mean(jnp.abs(pred_r - targ_r))
    assert jnp.allclose(err_r, ref_r, rtol=1e-5, atol=1e-5)

    # 5) Force the multi-tile / masked-last-tile / clamped-duplicate / 2-shard
    #    path at a small shape so it is exercised regardless of chip generation:
    #    rows = 20, tile_rows = 8 -> 3 tiles over 2 shards, partial last tile.
    pred_m = jax.random.normal(k3, (2, 4, 16, 20), jnp.float32)
    targ_m = jax.random.normal(k4, (2, 4, 16, 20), jnp.float32)
    err_m = _weighted_l1_mean(pred_m, targ_m, jnp.float32(1.0),
                              _test_tile_rows=8, _test_num_shards=2)
    jax.block_until_ready(err_m)
    ref_m = jnp.mean(jnp.abs(pred_m - targ_m))
    assert jnp.allclose(err_m, ref_m, rtol=1e-5, atol=1e-5)

    print("KERNEL_OK")
</pallas_src>

<mosaic_0001>
module attributes {stable_mosaic.version = 11 : i64} {
  func.func @_abs_diff_acc_kernel(%arg0: i32, %arg1: i32, %arg2: memref<16x128xf32, #tpu.memory_space<vmem>>, %arg3: memref<16x128xf32, #tpu.memory_space<vmem>>, %arg4: memref<1x8x128xf32, #tpu.memory_space<vmem>>) attributes {dimension_semantics = [#tpu.dimension_semantics<parallel>, #tpu.dimension_semantics<arbitrary>], iteration_bounds = array<i64: 1, 1>, scalar_prefetch = 0 : i64, scratch_operands = 0 : i64, tpu.core_type = #tpu.core_type<tc>, window_params = [{transform_indices = @transform_0, window_bounds = array<i64: 16, 128>}, {transform_indices = @transform_1, window_bounds = array<i64: 16, 128>}, {transform_indices = @transform_2, window_bounds = array<i64: 1, 8, 128>}]} {
    %c0_i32 = arith.constant 0 : i32
    %0 = arith.cmpi eq, %arg1, %c0_i32 : i32
    %1 = arith.extui %0 : i1 to i32
    %c0_i32_0 = arith.constant 0 : i32
    %2 = arith.cmpi ne, %1, %c0_i32_0 : i32
    scf.if %2 {
      %cst_10 = arith.constant 0.000000e+00 : f32
      %15 = vector.broadcast %cst_10 : f32 to vector<8x128xf32>
      %c0_11 = arith.constant 0 : index
      %c0_12 = arith.constant 0 : index
      %c0_13 = arith.constant 0 : index
      %16 = vector.load %arg4[%c0_11, %c0_12, %c0_13] : memref<1x8x128xf32, #tpu.memory_space<vmem>>, vector<1x8x128xf32>
      %17 = vector.shape_cast %16 : vector<1x8x128xf32> to vector<8x128xf32>
      %18 = vector.shape_cast %15 : vector<8x128xf32> to vector<1x8x128xf32>
      tpu.vector_store %arg4[%c0_11, %c0_12, %c0_13], %18 {strides = array<i32>} : memref<1x8x128xf32, #tpu.memory_space<vmem>>, vector<1x8x128xf32>,
    } else {
    }
    %c0 = arith.constant 0 : index
    %c0_1 = arith.constant 0 : index
    %3 = vector.load %arg2[%c0, %c0_1] : memref<16x128xf32, #tpu.memory_space<vmem>>, vector<16x128xf32>
    %c0_2 = arith.constant 0 : index
    %c0_3 = arith.constant 0 : index
    %4 = vector.load %arg3[%c0_2, %c0_3] : memref<16x128xf32, #tpu.memory_space<vmem>>, vector<16x128xf32>
    %5 = arith.subf %3, %4 : vector<16x128xf32>
    %6 = math.absf %5 : vector<16x128xf32>
    %c0_4 = arith.constant 0 : index
    %c0_5 = arith.constant 0 : index
    %c0_6 = arith.constant 0 : index
    %7 = vector.load %arg4[%c0_4, %c0_5, %c0_6] : memref<1x8x128xf32, #tpu.memory_space<vmem>>, vector<1x8x128xf32>
    %8 = vector.shape_cast %7 : vector<1x8x128xf32> to vector<8x128xf32>
    %9 = vector.shape_cast %6 : vector<16x128xf32> to vector<2x8x128xf32>
    %cst = arith.constant dense<0.000000e+00> : vector<8x128xf32>
    %10 = vector.multi_reduction <add>, %9, %cst [0] : vector<2x8x128xf32> to vector<8x128xf32>
    %11 = arith.addf %8, %10 : vector<8x128xf32>
    %c0_7 = arith.constant 0 : index
    %c0_8 = arith.constant 0 : index
    %c0_9 = arith.constant 0 : index
    %12 = vector.load %arg4[%c0_7, %c0_8, %c0_9] : memref<1x8x128xf32, #tpu.memory_space<vmem>>, vector<1x8x128xf32>
    %13 = vector.shape_cast %12 : vector<1x8x128xf32> to vector<8x128xf32>
    %14 = vector.shape_cast %11 : vector<8x128xf32> to vector<1x8x128xf32>
    tpu.vector_store %arg4[%c0_7, %c0_8, %c0_9], %14 {strides = array<i32>} : memref<1x8x128xf32, #tpu.memory_space<vmem>>, vector<1x8x128xf32>,
    return
  }
  func.func @transform_0(%arg0: i32, %arg1: i32) -> (i32, i32) {
    %c1_i32 = arith.constant 1 : i32
    %0 = arith.muli %arg0, %c1_i32 : i32
    %1 = arith.addi %0, %arg1 : i32
    %c0_i32 = arith.constant 0 : i32
    %2 = arith.minsi %1, %c0_i32 : i32
    %c0_i32_0 = arith.constant 0 : i32
    %c0_i32_1 = arith.constant 0 : i32
    return %2, %c0_i32_0 : i32, i32
  }
  func.func @transform_1(%arg0: i32, %arg1: i32) -> (i32, i32) {
    %c1_i32 = arith.constant 1 : i32
    %0 = arith.muli %arg0, %c1_i32 : i32
    %1 = arith.addi %0, %arg1 : i32
    %c0_i32 = arith.constant 0 : i32
    %2 = arith.minsi %1, %c0_i32 : i32
    %c0_i32_0 = arith.constant 0 : i32
    %c0_i32_1 = arith.constant 0 : i32
    return %2, %c0_i32_0 : i32, i32
  }
  func.func @transform_2(%arg0: i32, %arg1: i32) -> (i32, i32, i32) {
    %c0_i32 = arith.constant 0 : i32
    %c0_i32_0 = arith.constant 0 : i32
    %c0_i32_1 = arith.constant 0 : i32
    return %arg0, %c0_i32, %c0_i32_0 : i32, i32, i32
  }
}

</mosaic_0001>

<llo_original>
// kernel: tpu_custom_call.1
$region0: #{tpu_custom_call.1}
  #allocation0 [shape = 'u32[]', space=smem, size = 0x4, offset = 0x4, fixed_abs, tag = 'smem constant byte address 0x4 - core index']
  #allocation1 [shape = 'u32[144,128]{1,0:T(1,128)}', space=vmem, size = 0x12000, scoped, tag = 'internal scratch']
  %s0 = inlined_call_operand.hbm [shape: f32[16,128], index: 0, kind: input, shape index: {}]
  %s1 = inlined_call_operand.hbm [shape: f32[16,128], index: 1, kind: input, shape index: {}]
  %s2 = inlined_call_operand.hbm [shape: f32[1,8,128], index: 2, kind: output, shape index: {}]
  %s3 = sld [smem:[#allocation0]]
  $region30: #{tpu_custom_call.1} parent=0
    _
  %s5 = ssub.s32 1, %s3
  %s6 = scalar_select 0, %s5, %s3
  $region1: #{tpu_custom_call.1} parent=0
    #allocation2 [shape = 'u8[8192]{0}', space=vmem, size = 0x2000, scoped, tag = 'input window, operand 0, single buffered']
    #allocation3 [shape = 's32[1]{0}', space=sflag, size = 0x4, scoped, tag = 'scoped memory for tpu_custom_call.1']
    #allocation4 [shape = 's32[1]{0}', space=sflag, size = 0x4, scoped, tag = 'scoped memory for tpu_custom_call.1']
    #allocation5 [shape = 'u8[8192]{0}', space=vmem, size = 0x2000, scoped, tag = 'input window, operand 1, single buffered']
    #allocation6 [shape = 's32[1]{0}', space=sflag, size = 0x4, scoped, tag = 'scoped memory for tpu_custom_call.1']
    #allocation7 [shape = 'u8[4096]{0}', space=vmem, size = 0x1000, scoped, tag = 'output window, operand 0, single buffered']
    %7 = vsyncpa [#allocation3], 0
    %8 = vsyncpa [#allocation6], 0
    %9 = vsyncpa [#allocation4], 0
    // Predicated region
    $region2: #{tpu_custom_call.1} parent=1 // pred_check
      _
    $region3: #{tpu_custom_call.1} parent=1 // pred_check_branch
      %11 = sbr.rel (0) target = $region5
    $region4: #{tpu_custom_call.1} parent=1 // pred_region
      %s12 = sadd.s32 0, 0
      %p13 = scmp.lt.s32.totalorder %s12, 0
      %s14 = scalar_select %p13, %s12, 0
      %s15 = smul.u32 2, %s14
      %s17 = ssub.s32 256, 256
      %18 = vsyncadd [#allocation3], %s17
      %s19 = smul.addr %s15, 128
      %s20 = scalar_lea.hbm %s0, %s19
      %s21 = sshll.u32 [#allocation2], 4
      %s22 = int_to_ptr.vmem [resolvable:$true] %s21
      %27 = dma.hbm_to_vmem [thread:$0]  %s20, 256, %s22, [#allocation3], 128, 128, 8
    $region5: #{tpu_custom_call.1} parent=1 // pred_fallthru
      _
    // Predicated region
    $region6: #{tpu_custom_call.1} parent=1 // pred_check
      _
    $region7: #{tpu_custom_call.1} parent=1 // pred_check_branch
      %29 = sbr.rel (0) target = $region9
    $region8: #{tpu_custom_call.1} parent=1 // pred_region
      %s30 = sadd.s32 0, 0
      %p31 = scmp.lt.s32.totalorder %s30, 0
      %s32 = scalar_select %p31, %s30, 0
      %s33 = smul.u32 2, %s32
      %s35 = ssub.s32 256, 256
      %36 = vsyncadd [#allocation6], %s35
      %s37 = smul.addr %s33, 128
      %s38 = scalar_lea.hbm %s1, %s37
      %s39 = sshll.u32 [#allocation5], 4
      %s40 = int_to_ptr.vmem [resolvable:$true] %s39
      %45 = dma.hbm_to_vmem [thread:$0]  %s38, 256, %s40, [#allocation6], 128, 128, 8
    $region9: #{tpu_custom_call.1} parent=1 // pred_fallthru
      _
    // Predicated region
    $region10: #{tpu_custom_call.1} parent=1 // pred_check
      _
    $region11: #{tpu_custom_call.1} parent=1 // pred_check_branch
      %47 = sbr.rel (0) target = $region13
    $region12: #{tpu_custom_call.1} parent=1 // pred_region
      %48 = dma.done [#allocation3], 256
    $region13: #{tpu_custom_call.1} parent=1 // pred_fallthru
      _
    // Predicated region
    $region14: #{tpu_custom_call.1} parent=1 // pred_check
      _
    $region15: #{tpu_custom_call.1} parent=1 // pred_check_branch
      %50 = sbr.rel (0) target = $region17
    $region16: #{tpu_custom_call.1} parent=1 // pred_region
      %51 = dma.done [#allocation6], 256
    $region17: #{tpu_custom_call.1} parent=1 // pred_fallthru
      _
    %s52 = sadd.s32 0, 0
    %p53 = scmp.lt.s32.totalorder %s52, 0
    %s54 = scalar_select %p53, %s52, 0
    %s55 = smul.u32 2, %s54
    %s56 = sadd.s32 0, 0
    %p57 = scmp.lt.s32.totalorder %s56, 0
    %s58 = scalar_select %p57, %s56, 0
    %s59 = smul.u32 2, %s58
    %p60 = scmp.eq.s32.totalorder 0, 0
    // Predicated region
    $region18: #{tpu_custom_call.1} parent=1 // pred_check
      %p61 = pneg %p60
    $region19: #{tpu_custom_call.1} parent=1 // pred_check_branch
      %63 = sbr.rel (%p61) target = $region21
    $region20: #{tpu_custom_call.1} parent=1 // pred_region
      %64 = vst [vmem:[#allocation7] sm:$0xff] 0.0
    $region21: #{tpu_custom_call.1} parent=1 // pred_fallthru
      _
    %v65 = vld [vmem:[#allocation2] sm:$0xff]
    %v66 = vld [vmem:[#allocation2 + $0x8] sm:$0xff]
    %v67 = vld [vmem:[#allocation5] sm:$0xff]
    %v68 = vld [vmem:[#allocation5 + $0x8] sm:$0xff]
    %v69 = vsub.f32 %v65, %v67
    %v70 = vsub.f32 %v66, %v68
    %v71 = vand.u32 2147483647, %v69
    %v72 = vand.u32 2147483647, %v70
    %v73 = vld [vmem:[#allocation7] sm:$0xff]
    %v74 = vadd.f32 %v71, %v72
    %v75 = vadd.f32 %v73, %v74
    %76 = vst [vmem:[#allocation7] sm:$0xff] %v75
    // Predicated region
    $region22: #{tpu_custom_call.1} parent=1 // pred_check
      _
    $region23: #{tpu_custom_call.1} parent=1 // pred_check_branch
      %78 = sbr.rel (0) target = $region25
    $region24: #{tpu_custom_call.1} parent=1 // pred_region
      %s80 = ssub.s32 128, 128
      %81 = vsyncadd [#allocation4], %s80
      %s83 = sshll.u32 [#allocation7], 4
      %s84 = int_to_ptr.vmem [resolvable:$true] %s83
      %86 = dma.vmem_to_hbm [thread:$0]  %s84, 128, %s2, [#allocation4]
    $region25: #{tpu_custom_call.1} parent=1 // pred_fallthru
      _
    // Predicated region
    $region26: #{tpu_custom_call.1} parent=1 // pred_check
      _
    $region27: #{tpu_custom_call.1} parent=1 // pred_check_branch
      %88 = sbr.rel (0) target = $region29
    $region28: #{tpu_custom_call.1} parent=1 // pred_region
      %89 = dma.done [#allocation4], 128
    $region29: #{tpu_custom_call.1} parent=1 // pred_fallthru
      _
    %90 = vsyncpa [#allocation3], 1
    %91 = vsyncpa [#allocation6], 1
    %92 = vsyncpa [#allocation4], 1

</llo_original>
